<compile_context>
chip_gen: v7x
topology: tpu7x:2x2x1
jax: 0.10.0
libtpu: 0.0.40
codegen_flags: <defaults>
</compile_context>

<pallas_src>
import functools
import math

import jax
import jax.numpy as jnp
from jax import lax
from jax.experimental import pallas as pl
from jax.experimental.pallas import tpu as pltpu


# -----------------------------------------------------------------------------
# Helpers
# -----------------------------------------------------------------------------
def _round_up(x, m):
    return ((x + m - 1) // m) * m


def _lane_pad(d):
    # VMEM allocations pad the lane (last) dim to a multiple of 128.
    return _round_up(max(int(d), 1), 128)


def _vmem_budget_bytes():
    """Generation-aware per-kernel VMEM working-set budget."""
    cap = 64 * 1024 * 1024
    try:
        info = pltpu.get_tpu_info()
        cap = int(getattr(info, "vmem_capacity_bytes", cap) or cap)
    except Exception:
        pass  # conservative default (64 MiB-class) if the query is unavailable
    # 64 MiB-class parts (v7x): stay near the 32 MiB default scoped limit.
    # 128 MiB-class parts (v5e/v6e): ~48 MiB leaves headroom for the compiler.
    return 24 * 1024 * 1024 if cap <= 64 * 1024 * 1024 else 48 * 1024 * 1024


# -----------------------------------------------------------------------------
# Kernel 1: fused Q/K/V projection (bf16 MXU operands, f32 accumulation)
# -----------------------------------------------------------------------------
def _qkv_proj_kernel(x_ref, w_ref, b_ref, o_ref):
    # (tm, E)bf16 @ (E, tn)bf16 on the MXU with f32 accumulation; f32 bias on the VPU.
    acc = jnp.dot(x_ref[...], w_ref[...], preferred_element_type=jnp.float32)
    o_ref[...] = (acc + b_ref[...]).astype(o_ref.dtype)


def _proj_tiles(M, E, N, budget):
    # Block last dim must be a multiple of 128 or the full fused width N.
    tn_cands = [N] if N <= 512 else [512, 256, 128]
    tn = tn_cands[0]
    tm = min(512, _round_up(M, 8))

    def usage(tm_, tn_):
        # Every input is double-buffered by the BlockSpec pipeline — including the
        # weight / bias blocks whose index_map is constant along the row axis.
        x_b = tm_ * E * 2            # bf16 activation tile
        w_b = E * tn_ * 2            # bf16 weight tile
        b_b = _lane_pad(tn_) * 4     # f32 bias tile
        o_b = tm_ * tn_ * 2          # bf16 output tile
        return 2 * (x_b + w_b + b_b + o_b)

    while usage(tm, tn) > budget:
        smaller = [c for c in tn_cands if c < tn]
        if smaller:                       # prefer N-tiling so tm can stay large
            tn = smaller[0]
        elif tm > 8:
            tm = max(8, ((tm // 2) // 8) * 8)
        else:
            break
    return tm, tn


def qkv_projection(x2d, w_qkv, b_qkv, budget):
    """(M, E)bf16 @ (E, N)bf16 + b_f32 -> (M, N)bf16,  N = 2*dim_k + dim_v (fused Q|K|V)."""
    M, E = x2d.shape
    N = w_qkv.shape[1]
    tm, tn = _proj_tiles(M, E, N, budget)

    return pl.pallas_call(
        _qkv_proj_kernel,
        out_shape=jax.ShapeDtypeStruct((M, N), jnp.bfloat16),
        grid_spec=pltpu.PrefetchScalarGridSpec(
            num_scalar_prefetch=0,
            grid=(pl.cdiv(M, tm), pl.cdiv(N, tn)),
            in_specs=[
                pl.BlockSpec((tm, E), lambda i, j: (i, 0)),   # activation rows
                pl.BlockSpec((E, tn), lambda i, j: (0, j)),   # weight column tile
                pl.BlockSpec((1, tn), lambda i, j: (0, j)),   # bias column tile
            ],
            out_specs=pl.BlockSpec((tm, tn), lambda i, j: (i, j)),
        ),
        compiler_params=pltpu.CompilerParams(
            dimension_semantics=("parallel", "parallel"),
            vmem_limit_bytes=budget + 8 * 1024 * 1024,
        ),
        cost_estimate=pl.CostEstimate(
            flops=2 * M * E * N,
            transcendentals=0,
            bytes_accessed=2 * (M * E + E * N + M * N) + 4 * N,
        ),
    )(x2d, w_qkv, b_qkv)


# -----------------------------------------------------------------------------
# Kernel 2: flash-style attention reading the fused qkv buffer directly
# -----------------------------------------------------------------------------
def _flash_attn_kernel(q_ref, kv_ref, o_ref, q_sc, m_sc, l_sc, acc_sc, *,
                       num_head, hdk, hdv, dim_k, seq_len, tk):
    ki = pl.program_id(2)
    last_k = pl.num_programs(2) - 1

    @pl.when(ki == 0)
    def _init():
        m_sc[...] = jnp.full(m_sc.shape, -jnp.inf, dtype=m_sc.dtype)
        l_sc[...] = jnp.zeros(l_sc.shape, dtype=l_sc.dtype)
        acc_sc[...] = jnp.zeros(acc_sc.shape, dtype=acc_sc.dtype)
        # Stash per-head q (scale already folded into Wq/bq) once per q tile;
        # it is reused across all kv steps without re-slicing or re-scaling.
        for h in range(num_head):
            q_sc[h] = q_ref[0, :, pl.ds(h * hdk, hdk)]

    # kv tail mask only exists when the kv tile does not divide the sequence length.
    need_mask = (seq_len % tk) != 0
    if need_mask:
        kv_pos = ki * tk + lax.broadcasted_iota(jnp.int32, (1, tk), 1)
        kv_valid = kv_pos < seq_len

    dn_qk = (((1,), (1,)), ((), ()))   # contract last dims: (tq,d) . (tk,d) -> (tq,tk)

    for h in range(num_head):
        k_h = kv_ref[0, :, pl.ds(dim_k + h * hdk, hdk)]        # (tk, hdk) bf16
        v_h = kv_ref[0, :, pl.ds(2 * dim_k + h * hdv, hdv)]    # (tk, hdv) bf16

        # bf16 x bf16 -> f32 on the MXU; no k transpose (contraction on last dims).
        s = lax.dot_general(q_sc[h], k_h, dn_qk,
                            preferred_element_type=jnp.float32)  # (tq, tk) f32
        if need_mask:
            s = jnp.where(kv_valid, s, -jnp.inf)

        # Online softmax — all stats in f32 (v5e-safe), exp on the EUP.
        m_prev = m_sc[h]                                          # (tq, 1)
        m_new = jnp.maximum(m_prev, jnp.max(s, axis=-1, keepdims=True))
        alpha = jnp.exp(m_prev - m_new)
        p = jnp.exp(s - m_new)

        l_sc[h] = alpha * l_sc[h] + jnp.sum(p, axis=-1, keepdims=True)
        acc_sc[h] = alpha * acc_sc[h] + jnp.dot(
            p.astype(jnp.bfloat16), v_h, preferred_element_type=jnp.float32)
        m_sc[h] = m_new

    @pl.when(ki == last_k)
    def _finalize():
        # Write the lane-dense (tq, dim_v) output block: head h occupies columns
        # [h*hdv, (h+1)*hdv), matching the reference (b, s, H, hdv) -> (b, s, dim_v).
        for h in range(num_head):
            inv_l = pl.reciprocal(l_sc[h], approx=True)           # EUP slot
            o_ref[0, :, pl.ds(h * hdv, hdv)] = (acc_sc[h] * inv_l).astype(o_ref.dtype)


def _attn_tiles(S, H, hdk, hdv, n_qkv, dim_v, budget):
    # tk >= 256 keeps the P.V contraction filling a 256-wide MXU (v6e/v7x);
    # tq <= 256 bounds the (tq, tk) score tensor and the accumulator scratch.
    tq = min(256, _round_up(S, 8))
    tk = min(512, _round_up(S, 8))

    def usage(tq_, tk_):
        q_blk = 2 * tq_ * n_qkv * 2                      # bf16, double buffered
        kv_blk = 2 * tk_ * n_qkv * 2
        o_blk = 2 * tq_ * _lane_pad(dim_v) * 4
        scratch = H * tq_ * (_lane_pad(hdk) * 2          # q_sc (bf16)
                             + 2 * _lane_pad(1) * 4      # m_sc, l_sc (f32, lane padded)
                             + _lane_pad(hdv) * 4)       # acc_sc (f32)
        score_tmp = 2 * tq_ * _lane_pad(tk_) * 4         # live (tq, tk) f32 temporaries
        return q_blk + kv_blk + o_blk + scratch + score_tmp

    while usage(tq, tk) > budget and (tq > 8 or tk > 8):
        if tk >= tq and tk > 8:
            tk = max(8, ((tk // 2) // 8) * 8)
        else:
            tq = max(8, ((tq // 2) // 8) * 8)
    return tq, tk


def mh_attention_core(qkv3, num_head, dim_k, dim_v, budget):
    # qkv3: (B, S, 2*dim_k + dim_v) bf16, columns = [Q | K | V], heads inner.
    B, S, n_qkv = qkv3.shape
    hdk = dim_k // num_head
    hdv = dim_v // num_head
    tq, tk = _attn_tiles(S, num_head, hdk, hdv, n_qkv, dim_v, budget)
    nq, nk = pl.cdiv(S, tq), pl.cdiv(S, tk)

    kernel = functools.partial(
        _flash_attn_kernel, num_head=num_head, hdk=hdk, hdv=hdv,
        dim_k=dim_k, seq_len=S, tk=tk)

    return pl.pallas_call(
        kernel,
        out_shape=jax.ShapeDtypeStruct((B, S, dim_v), jnp.float32),
        grid_spec=pltpu.PrefetchScalarGridSpec(
            num_scalar_prefetch=0,
            grid=(B, nq, nk),
            in_specs=[
                # Same fused qkv buffer passed twice: once blocked by query rows
                # (resident across the kv axis), once blocked by kv rows.
                pl.BlockSpec((1, tq, n_qkv), lambda b, qi, ki: (b, qi, 0)),
                pl.BlockSpec((1, tk, n_qkv), lambda b, qi, ki: (b, ki, 0)),
            ],
            out_specs=pl.BlockSpec((1, tq, dim_v), lambda b, qi, ki: (b, qi, 0)),
            scratch_shapes=[
                pltpu.VMEM((num_head, tq, hdk), jnp.bfloat16),   # per-head q
                pltpu.VMEM((num_head, tq, 1), jnp.float32),      # running max   m
                pltpu.VMEM((num_head, tq, 1), jnp.float32),      # running denom l
                pltpu.VMEM((num_head, tq, hdv), jnp.float32),    # output accumulator
            ],
        ),
        compiler_params=pltpu.CompilerParams(
            dimension_semantics=("parallel", "parallel", "arbitrary"),
            vmem_limit_bytes=budget + 8 * 1024 * 1024,
        ),
        cost_estimate=pl.CostEstimate(
            flops=2 * B * num_head * S * S * (hdk + hdv),
            transcendentals=B * num_head * S * S,
            bytes_accessed=2 * B * S * n_qkv * (1 + nq) + 4 * B * S * dim_v,
        ),
    )(qkv3, qkv3)


# -----------------------------------------------------------------------------
# Full module forward (no HBM round trips between the two kernels)
# -----------------------------------------------------------------------------
def mh_attention_forward(x, params, num_head, dim_k, dim_v):
    b, s, e = x.shape
    hdk = dim_k // num_head
    scale = 1.0 / math.sqrt(hdk)
    budget = _vmem_budget_bytes()

    # Fold the softmax scale into the q projection (one-time host transform) and fuse
    # Q|K|V into a single wide matmul.  bf16 operands feed the MXU; bias stays f32.
    w_qkv = jnp.concatenate(
        [params["wq"] * scale, params["wk"], params["wv"]], axis=1).astype(jnp.bfloat16)
    b_qkv = jnp.concatenate(
        [params["bq"] * scale, params["bk"], params["bv"]], axis=1).astype(jnp.float32)

    x2d = x.reshape(b * s, e).astype(jnp.bfloat16)
    qkv = qkv_projection(x2d, w_qkv, b_qkv, budget)       # (b*s, 2*dim_k+dim_v) bf16

    # Free metadata reshape only — the attention kernel splits heads with in-VMEM lane
    # slices and writes (b, s, dim_v) directly, so no slicing/transpose passes in XLA.
    qkv3 = qkv.reshape(b, s, 2 * dim_k + dim_v)
    return mh_attention_core(qkv3, num_head, dim_k, dim_v, budget)


# Pure-JAX f32 reference for verification
def reference_forward(x, params, num_head, dim_k, dim_v):
    b, s, e = x.shape
    hdk = dim_k // num_head
    hdv = dim_v // num_head
    scale = 1.0 / math.sqrt(hdk)
    q = (x @ params["wq"] + params["bq"]).reshape(b, s, num_head, hdk).transpose(0, 2, 1, 3)
    k = (x @ params["wk"] + params["bk"]).reshape(b, s, num_head, hdk).transpose(0, 2, 1, 3)
    v = (x @ params["wv"] + params["bv"]).reshape(b, s, num_head, hdv).transpose(0, 2, 1, 3)
    dist = jax.nn.softmax(jnp.einsum("bhqd,bhkd->bhqk", q, k) * scale, axis=-1)
    out = jnp.einsum("bhqk,bhkd->bhqd", dist, v)
    return out.transpose(0, 2, 1, 3).reshape(b, s, dim_v)


if __name__ == "__main__":
    # Small shapes consistent with the module: 8 heads, dims divisible by 8.
    B, S = 2, 8
    DIM_IN, DIM_K, DIM_V = 32, 32, 32
    NUM_HEAD = 8

    key = jax.random.PRNGKey(0)
    kx, kwq, kbq, kwk, kbk, kwv, kbv = jax.random.split(key, 7)

    bound = 1.0 / math.sqrt(DIM_IN)
    params = {
        "wq": jax.random.uniform(kwq, (DIM_IN, DIM_K), jnp.float32, -bound, bound),
        "bq": jax.random.uniform(kbq, (1, DIM_K), jnp.float32, -bound, bound),
        "wk": jax.random.uniform(kwk, (DIM_IN, DIM_K), jnp.float32, -bound, bound),
        "bk": jax.random.uniform(kbk, (1, DIM_K), jnp.float32, -bound, bound),
        "wv": jax.random.uniform(kwv, (DIM_IN, DIM_V), jnp.float32, -bound, bound),
        "bv": jax.random.uniform(kbv, (1, DIM_V), jnp.float32, -bound, bound),
    }

    x = jax.random.normal(kx, (B, S, DIM_IN), jnp.float32)

    out = mh_attention_forward(x, params, NUM_HEAD, DIM_K, DIM_V)
    out = jax.block_until_ready(out)

    ref = reference_forward(x, params, NUM_HEAD, DIM_K, DIM_V)
    assert out.shape == (B, S, DIM_V), out.shape
    # bf16 MXU operands + bf16 qkv intermediate + EUP approximate reciprocal in the
    # softmax denominator -> compare against the pure-f32 reference with a relaxed
    # tolerance (mixed-precision policy, not a bug).
    max_diff = float(jnp.max(jnp.abs(out - ref)))
    assert jnp.allclose(out, ref, atol=5e-2, rtol=5e-2), max_diff

    print("KERNEL_OK")
</pallas_src>

<mosaic_0001>
module attributes {stable_mosaic.version = 11 : i64} {
  func.func @_qkv_proj_kernel(%arg0: i32, %arg1: i32, %arg2: memref<16x32xbf16, #tpu.memory_space<vmem>>, %arg3: memref<32x96xbf16, #tpu.memory_space<vmem>>, %arg4: memref<1x96xf32, #tpu.memory_space<vmem>>, %arg5: memref<16x96xbf16, #tpu.memory_space<vmem>>) attributes {dimension_semantics = [#tpu.dimension_semantics<parallel>, #tpu.dimension_semantics<parallel>], iteration_bounds = array<i64: 1, 1>, scalar_prefetch = 0 : i64, scratch_operands = 0 : i64, tpu.core_type = #tpu.core_type<tc>, window_params = [{transform_indices = @transform_0, window_bounds = array<i64: 16, 32>}, {transform_indices = @transform_1, window_bounds = array<i64: 32, 96>}, {transform_indices = @transform_2, window_bounds = array<i64: 1, 96>}, {transform_indices = @transform_3, window_bounds = array<i64: 16, 96>}]} {
    %c0 = arith.constant 0 : index
    %c0_0 = arith.constant 0 : index
    %0 = vector.load %arg2[%c0, %c0_0] : memref<16x32xbf16, #tpu.memory_space<vmem>>, vector<16x32xbf16>
    %c0_1 = arith.constant 0 : index
    %c0_2 = arith.constant 0 : index
    %1 = vector.load %arg3[%c0_1, %c0_2] : memref<32x96xbf16, #tpu.memory_space<vmem>>, vector<32x96xbf16>
    %cst = arith.constant dense<0.000000e+00> : vector<16x96xf32>
    %2 = tpu.matmul %0, %1, %cst {dimension_numbers = #tpu.dot_dimension_numbers<[1], [0], [0], [1], [0, 0, 1, 1], [], []>} : vector<16x32xbf16>, vector<32x96xbf16>, vector<16x96xf32> -> vector<16x96xf32>
    %c0_3 = arith.constant 0 : index
    %c0_4 = arith.constant 0 : index
    %3 = vector.load %arg4[%c0_3, %c0_4] : memref<1x96xf32, #tpu.memory_space<vmem>>, vector<1x96xf32>
    %4 = vector.broadcast %3 : vector<1x96xf32> to vector<16x96xf32>
    %5 = arith.addf %2, %4 : vector<16x96xf32>
    %6 = arith.truncf %5 : vector<16x96xf32> to vector<16x96xbf16>
    %c0_5 = arith.constant 0 : index
    %c0_6 = arith.constant 0 : index
    %7 = vector.load %arg5[%c0_5, %c0_6] : memref<16x96xbf16, #tpu.memory_space<vmem>>, vector<16x96xbf16>
    tpu.vector_store %arg5[%c0_5, %c0_6], %6 {strides = array<i32>} : memref<16x96xbf16, #tpu.memory_space<vmem>>, vector<16x96xbf16>,
    return
  }
  func.func @transform_0(%arg0: i32, %arg1: i32) -> (i32, i32) {
    %c0_i32 = arith.constant 0 : i32
    %c0_i32_0 = arith.constant 0 : i32
    return %arg0, %c0_i32 : i32, i32
  }
  func.func @transform_1(%arg0: i32, %arg1: i32) -> (i32, i32) {
    %c0_i32 = arith.constant 0 : i32
    %c0_i32_0 = arith.constant 0 : i32
    return %c0_i32, %arg1 : i32, i32
  }
  func.func @transform_2(%arg0: i32, %arg1: i32) -> (i32, i32) {
    %c0_i32 = arith.constant 0 : i32
    %c0_i32_0 = arith.constant 0 : i32
    return %c0_i32, %arg1 : i32, i32
  }
  func.func @transform_3(%arg0: i32, %arg1: i32) -> (i32, i32) {
    %c0_i32 = arith.constant 0 : i32
    return %arg0, %arg1 : i32, i32
  }
}

</mosaic_0001>

<llo_original>
// kernel: tpu_custom_call.1
$region0: #{tpu_custom_call.1}
  #allocation0 [shape = 'u32[]', space=smem, size = 0x4, offset = 0x4, fixed_abs, tag = 'smem constant byte address 0x4 - core index']
  #allocation1 [shape = 'u32[144,128]{1,0:T(1,128)}', space=vmem, size = 0x12000, scoped, tag = 'internal scratch']
  %s0 = inlined_call_operand.hbm [shape: bf16[16,32], index: 0, kind: input, shape index: {}]
  %s1 = inlined_call_operand.hbm [shape: bf16[32,96], index: 1, kind: input, shape index: {}]
  %s2 = inlined_call_operand.vmem [shape: f32[1,96], index: 2, kind: input, shape index: {}]
  %s3 = inlined_call_operand.hbm [shape: bf16[16,96], index: 3, kind: output, shape index: {}]
  %s4 = sld [smem:[#allocation0]]
  $region30: #{tpu_custom_call.1} parent=0
    _
  %s6 = ssub.s32 1, %s4
  %s7 = scalar_select 0, %s6, %s4
  $region1: #{tpu_custom_call.1} parent=0
    #allocation2 [shape = 'u8[4096]{0}', space=vmem, size = 0x1000, scoped, tag = 'input window, operand 0, single buffered']
    #allocation3 [shape = 's32[1]{0}', space=sflag, size = 0x4, scoped, tag = 'scoped memory for tpu_custom_call.1']
    #allocation4 [shape = 's32[1]{0}', space=sflag, size = 0x4, scoped, tag = 'scoped memory for tpu_custom_call.1']
    #allocation5 [shape = 'u8[8192]{0}', space=vmem, size = 0x2000, scoped, tag = 'input window, operand 1, single buffered']
    #allocation6 [shape = 's32[1]{0}', space=sflag, size = 0x4, scoped, tag = 'scoped memory for tpu_custom_call.1']
    #allocation7 [shape = 'u8[4096]{0}', space=vmem, size = 0x1000, scoped, tag = 'output window, operand 0, single buffered']
    %8 = vsyncpa [#allocation3], 0
    %9 = vsyncpa [#allocation6], 0
    %10 = vsyncpa [#allocation4], 0
    // Predicated region
    $region2: #{tpu_custom_call.1} parent=1 // pred_check
      _
    $region3: #{tpu_custom_call.1} parent=1 // pred_check_branch
      %12 = sbr.rel (0) target = $region5
    $region4: #{tpu_custom_call.1} parent=1 // pred_region
      %s14 = ssub.s32 128, 128
      %15 = vsyncadd [#allocation3], %s14
      %s16 = sshll.u32 [#allocation2], 4
      %s17 = int_to_ptr.vmem [resolvable:$true] %s16
      %22 = dma.hbm_to_vmem [thread:$0]  %s0, 128, %s17, [#allocation3], 64, 64, 4
    $region5: #{tpu_custom_call.1} parent=1 // pred_fallthru
      _
    // Predicated region
    $region6: #{tpu_custom_call.1} parent=1 // pred_check
      _
    $region7: #{tpu_custom_call.1} parent=1 // pred_check_branch
      %24 = sbr.rel (0) target = $region9
    $region8: #{tpu_custom_call.1} parent=1 // pred_region
      %s26 = ssub.s32 256, 256
      %27 = vsyncadd [#allocation6], %s26
      %s28 = sshll.u32 [#allocation5], 4
      %s29 = int_to_ptr.vmem [resolvable:$true] %s28
      %34 = dma.hbm_to_vmem [thread:$0]  %s1, 256, %s29, [#allocation6], 64, 64, 4
    $region9: #{tpu_custom_call.1} parent=1 // pred_fallthru
      _
    // Predicated region
    $region10: #{tpu_custom_call.1} parent=1 // pred_check
      _
    $region11: #{tpu_custom_call.1} parent=1 // pred_check_branch
      %36 = sbr.rel (0) target = $region13
    $region12: #{tpu_custom_call.1} parent=1 // pred_region
      _
    $region13: #{tpu_custom_call.1} parent=1 // pred_fallthru
      _
    // Predicated region
    $region14: #{tpu_custom_call.1} parent=1 // pred_check
      _
    $region15: #{tpu_custom_call.1} parent=1 // pred_check_branch
      %38 = sbr.rel (0) target = $region17
    $region16: #{tpu_custom_call.1} parent=1 // pred_region
      %39 = dma.done [#allocation3], 128
    $region17: #{tpu_custom_call.1} parent=1 // pred_fallthru
      _
    // Predicated region
    $region18: #{tpu_custom_call.1} parent=1 // pred_check
      _
    $region19: #{tpu_custom_call.1} parent=1 // pred_check_branch
      %41 = sbr.rel (0) target = $region21
    $region20: #{tpu_custom_call.1} parent=1 // pred_region
      %42 = dma.done [#allocation6], 256
    $region21: #{tpu_custom_call.1} parent=1 // pred_fallthru
      _
    %v44 = vld [vmem:[#allocation2] sm:$0xf]
    %v45 = vld [vmem:[#allocation2 + $0x4] sm:$0xf]
    %v46 = vld [vmem:[#allocation5] sm:$0xf]
    %v47 = vld [vmem:[#allocation5 + $0x4] sm:$0xf]
    %v48 = vld [vmem:[#allocation5 + $0x8] sm:$0xf]
    %v49 = vld [vmem:[#allocation5 + $0xc] sm:$0xf]
    %v50 = vld [vmem:[%s2] sm:$0x1]
    %v52 = vlaneseq
    %v53 = vshrl.u32 %v52, 7
    %v54 = vsub.s32 0, %v53
    %v55 = vrot.slane %v50, %v54
    %v59 = vunpack.c.l.b16 %v44
    %v60 = vunpack.c.l.b16 %v45
    %v61 = vpack.c.b16 %v60, %v59
    %v66 = vunpack.c.l.b16 %v46
    %v67 = vunpack.c.l.b16 %v47
    %v68 = vunpack.c.l.b16 %v48
    %v69 = vunpack.c.l.b16 %v49
    %v70 = vpack.c.b16 %v67, %v66
    %v71 = vpack.c.b16 %v69, %v68
    %vm74 = vcmask 261120
    %v76 = vsel %vm74, %v61, 0
    %78 = vmatprep.subr.bf16.mxu0 0
    %79 = vmatpush1.bf16.msra.mxu0 %v70
    %80 = vmatprep.subr.bf16.mxu0 0
    %81 = vmatpush1.bf16.msra.mxu0 %v71
    %82 = vmatprep.subr.bf16.mxu0 0
    %83 = vmatpush1.bf16.msra.mxu0 0
    %84 = vmatprep.subr.bf16.mxu0 0
    %85 = vmatpush1.bf16.msra.mxu0 0
    %86 = vmatprep.subr.bf16.mxu0 0
    %87 = vmatpush1.bf16.msra.mxu0 0
    %88 = vmatprep.subr.bf16.mxu0 0
    %89 = vmatpush1.bf16.msra.mxu0 0
    %90 = vmatprep.subr.bf16.mxu0 0
    %91 = vmatpush1.bf16.msra.mxu0 0
    %92 = vmatprep.subr.bf16.mxu0 0
    %93 = vmatpush1.bf16.msra.mxu0 0
    %94 = vmatprep.subr.bf16.mxu0 0
    %95 = vmatpush1.bf16.msra.mxu0 0
    %96 = vmatprep.subr.bf16.mxu0 0
    %97 = vmatpush1.bf16.msra.mxu0 0
    %98 = vmatprep.subr.bf16.mxu0 0
    %99 = vmatpush1.bf16.msra.mxu0 0
    %100 = vmatprep.subr.bf16.mxu0 0
    %101 = vmatpush1.bf16.msra.mxu0 0
    %102 = vmatprep.subr.bf16.mxu0 0
    %103 = vmatpush1.bf16.msra.mxu0 0
    %104 = vmatprep.subr.bf16.mxu0 0
    %105 = vmatpush1.bf16.msra.mxu0 0
    %106 = vmatprep.subr.bf16.mxu0 0
    %107 = vmatpush1.bf16.msra.mxu0 0
    %108 = vmatprep.subr.bf16.mxu0 0
    %109 = vmatpush1.bf16.msra.mxu0 0
    %110 = vmatprep.mubr.bf16.mxu0 0
    %111 = vmatmul.mubr.bf16.gmra.mrb[0].mxu0 %v76
    %v112 = vpop.f32.mrb[0].mxu0
    %v113 = vadd.f32 %v55, %v112
    %v114 = vpop.f32.mrb[0].mxu0
    %v115 = vpop.f32.mrb[0].mxu0
    %v116 = vadd.f32 %v55, %v115
    %v117 = vpop.f32.mrb[0].mxu0
    %118 = vdwg.mxu0
    %v119 = vpack.c.bf16 %v116, %v113
    %v121 = vunpack.c.l.b16 %v119
    %v122 = vunpack.c.h.b16 %v119
    %v123 = vpack.c.b16 %v121, %v121
    %v124 = vpack.c.b16 %v122, %v122
    %vm127 = vcmask 781312
    %128 = vst.msk [vmem:[#allocation7] sm:$0xf] %vm127, %v123
    %129 = vst.msk [vmem:[#allocation7 + $0x4] sm:$0xf] %vm127, %v124
    // Predicated region
    $region22: #{tpu_custom_call.1} parent=1 // pred_check
      _
    $region23: #{tpu_custom_call.1} parent=1 // pred_check_branch
      %131 = sbr.rel (0) target = $region25
    $region24: #{tpu_custom_call.1} parent=1 // pred_region
      %s133 = ssub.s32 128, 128
      %134 = vsyncadd [#allocation4], %s133
      %s135 = sshll.u32 [#allocation7], 4
      %s136 = int_to_ptr.vmem [resolvable:$true] %s135
      %141 = dma.vmem_to_hbm [thread:$0]  %s136, 128, %s3, [#allocation4], 64, 64, 4
    $region25: #{tpu_custom_call.1} parent=1 // pred_fallthru
      _
    // Predicated region
    $region26: #{tpu_custom_call.1} parent=1 // pred_check
      _
    $region27: #{tpu_custom_call.1} parent=1 // pred_check_branch
      %143 = sbr.rel (0) target = $region29
    $region28: #{tpu_custom_call.1} parent=1 // pred_region
      %144 = dma.done [#allocation4], 128
    $region29: #{tpu_custom_call.1} parent=1 // pred_fallthru
      _
    %145 = vsyncpa [#allocation3], 1
    %146 = vsyncpa [#allocation6], 1
    %147 = vsyncpa [#allocation4], 1

</llo_original>
